<compile_context>
chip_gen: v7x
topology: tpu7x:2x2x1
jax: 0.10.0
libtpu: 0.0.40
codegen_flags: <defaults>
</compile_context>

<pallas_src>
import math

import jax
import jax.numpy as jnp
import numpy as np
from jax.experimental import pallas as pl
from jax.experimental.pallas import tpu as pltpu

DIM = 16
TIME_DIM = DIM * 4          # 64
LAYERS = 3
LANE = 128
# Batch tile on the lane axis; sweep 1024/2048/4096 (stay at 1024 on v5e, see header).
TILE_B = 1024

# ---- packed-parameter slab layout (rows aligned to 8 sublanes, 128 lanes wide) ----
def _align8(n):
    return ((n + 7) // 8) * 8

SLAB_LANES = 128
TW1_R0 = 0                                   # (64, 16)  time Linear(dim, 4*dim) weight
TW2_R0 = TW1_R0 + _align8(TIME_DIM)          # (16, 64)  time Linear(4*dim, dim) weight
W1_R0 = TW2_R0 + _align8(DIM)                # (16, 16)
W2_R0 = W1_R0 + _align8(DIM)                 # (16, 16)
W3_R0 = W2_R0 + _align8(DIM)                 # (16, 16)
VEC_R0 = W3_R0 + _align8(DIM)                # (16, 128) one column-vector param per lane
TB1_R0 = VEC_R0 + _align8(DIM)               # (64, 1)   time Linear(dim, 4*dim) bias
SLAB_ROWS = TB1_R0 + _align8(TIME_DIM)       # 208 rows total (~106 KiB)

# lane assignment inside the VEC block
L_WIN, L_BIN, L_FREQ, L_PHASE, L_TB2, L_B1, L_B2, L_B3, L_WOUT, L_BOUT = range(10)

_GELU_K = 0.7978845608028654   # sqrt(2/pi)


def _gelu_tanh(v):
    # tanh-approximate GELU: transcendental goes to the EUP slot (free vs. VALU erf).
    # (The cheaper sigmoid form would halve VALU ops but drifts ~1e-2 from erf-GELU;
    #  only switch if a bundle dump shows VALU as the saturated slot.)
    return 0.5 * v * (1.0 + jnp.tanh(_GELU_K * (v + 0.044715 * v * v * v)))


def one_d_kernel(xt_ref, slab_ref, o_ref):
    x = xt_ref[0:1, :]                                   # (1, TILE_B)  batch on lanes
    t = xt_ref[1:2, :]                                   # (1, TILE_B)

    # column-vector params: (DIM, 1) slices of the slab's vector block
    # (splat-per-grid-step cost is negligible now that tiles are large)
    w_in = slab_ref[VEC_R0:VEC_R0 + DIM, L_WIN:L_WIN + 1]
    b_in = slab_ref[VEC_R0:VEC_R0 + DIM, L_BIN:L_BIN + 1]
    freqs = slab_ref[VEC_R0:VEC_R0 + DIM, L_FREQ:L_FREQ + 1]
    phase = slab_ref[VEC_R0:VEC_R0 + DIM, L_PHASE:L_PHASE + 1]
    tb2 = slab_ref[VEC_R0:VEC_R0 + DIM, L_TB2:L_TB2 + 1]
    b1 = slab_ref[VEC_R0:VEC_R0 + DIM, L_B1:L_B1 + 1]
    b2 = slab_ref[VEC_R0:VEC_R0 + DIM, L_B2:L_B2 + 1]
    b3 = slab_ref[VEC_R0:VEC_R0 + DIM, L_B3:L_B3 + 1]
    w_out = slab_ref[VEC_R0:VEC_R0 + DIM, L_WOUT:L_WOUT + 1]
    b_out = slab_ref[VEC_R0:VEC_R0 + 1, L_BOUT:L_BOUT + 1]          # (1, 1) scalar

    # main[0]: Linear(1, dim) as an outer-product broadcast -> (DIM, TILE_B), f32
    h = w_in * x + b_in

    # time_mlp: fused SinusoidalPosEmb (cos(a) == sin(a + pi/2), no concatenate)
    # sin argument stays f32 (t can be ~1000; bf16 here would wreck the phase).
    emb = jnp.sin(freqs * t + phase)                     # (DIM, TILE_B)
    # TODO(synk): on v5e with TILE_B > 1024, strip-mine this (64, TILE_B) block over
    # lane-group chunks so spills of `g` don't bind the single vst slot.
    tw1 = slab_ref[TW1_R0:TW1_R0 + TIME_DIM, 0:DIM].astype(jnp.bfloat16)   # (64, 16)
    tb1 = slab_ref[TB1_R0:TB1_R0 + TIME_DIM, 0:1]                          # (64, 1)
    g = jnp.dot(tw1, emb.astype(jnp.bfloat16),
                preferred_element_type=jnp.float32) + tb1                  # (64, TILE_B)
    g = _gelu_tanh(g)
    tw2 = slab_ref[TW2_R0:TW2_R0 + DIM, 0:TIME_DIM].astype(jnp.bfloat16)   # (16, 64)
    temb = jnp.dot(tw2, g.astype(jnp.bfloat16),
                   preferred_element_type=jnp.float32) + tb2               # (16, TILE_B)

    # main[1:]: GELU, then (Linear(dim,dim), GELU) x 3, then Linear(dim, 1)
    h = _gelu_tanh(h + temb)
    w1 = slab_ref[W1_R0:W1_R0 + DIM, 0:DIM].astype(jnp.bfloat16)
    h = _gelu_tanh(jnp.dot(w1, h.astype(jnp.bfloat16),
                           preferred_element_type=jnp.float32) + b1)
    w2 = slab_ref[W2_R0:W2_R0 + DIM, 0:DIM].astype(jnp.bfloat16)
    h = _gelu_tanh(jnp.dot(w2, h.astype(jnp.bfloat16),
                           preferred_element_type=jnp.float32) + b2)
    w3 = slab_ref[W3_R0:W3_R0 + DIM, 0:DIM].astype(jnp.bfloat16)
    h = _gelu_tanh(jnp.dot(w3, h.astype(jnp.bfloat16),
                           preferred_element_type=jnp.float32) + b3)

    # Final Linear(dim, 1): f32 sublane reduction -> lane-dense (1, TILE_B) output row.
    o_ref[...] = jnp.sum(h * w_out, axis=0, keepdims=True) + b_out


def _round_up(n, m):
    return ((n + m - 1) // m) * m


def one_d_model_forward(x_t, t, slab, *, tile_b=TILE_B):
    """x_t: (B, 1, 1, 1) NCHW, t: (B,) -> (B, 1, 1, 1)."""
    B = x_t.shape[0]
    # Cap the tile so the batch grid has >= 2 steps whenever B allows it, so the
    # "parallel" axis can shard across v7x's two TensorCores (no effect on v5e/v6e).
    tile = min(tile_b, max(LANE, _round_up(pl.cdiv(B, 2), LANE)))
    n_tiles = pl.cdiv(B, tile)
    Bp = n_tiles * tile
    pad = Bp - B
    # single (2, Bp) lane-dense input slab: row 0 = x, row 1 = t -> one DMA per step
    xt = jnp.stack([x_t.reshape(B), t.reshape(B)]).astype(jnp.float32)
    xt = jnp.pad(xt, ((0, 0), (0, pad)))

    out_row = pl.pallas_call(
        one_d_kernel,
        out_shape=jax.ShapeDtypeStruct((1, Bp), jnp.float32),
        grid_spec=pltpu.PrefetchScalarGridSpec(
            num_scalar_prefetch=0,
            grid=(n_tiles,),
            in_specs=[
                pl.BlockSpec((2, tile), lambda i: (0, i)),                # packed x/t
                pl.BlockSpec((SLAB_ROWS, SLAB_LANES), lambda i: (0, 0)),  # weight slab
            ],
            out_specs=pl.BlockSpec((1, tile), lambda i: (0, i)),
        ),
        compiler_params=pltpu.CompilerParams(
            # TODO(synk): on v7x, confirm in the bundle dump that this single
            # "parallel" axis actually shards across both TensorCores; if not,
            # switch to pltpu.CORE_PARALLEL / an explicit 2-wide leading axis.
            dimension_semantics=("parallel",)),
    )(xt, slab)
    return out_row[0, :B].reshape(B, 1, 1, 1)


# ---------------------------- parameters & packing ----------------------------
def init_params(key, dim=DIM):
    """Deterministic synthetic parameters, PyTorch Linear conventions: W (out, in), b (out,)."""
    time_dim = dim * 4
    half = dim // 2
    freqs = jnp.exp(jnp.arange(half, dtype=jnp.float32)
                    * -(math.log(10000.0) / (half - 1)))     # SinusoidalPosEmb freqs
    keys = jax.random.split(key, 7)

    def lin(k, fan_in, fan_out):
        kw, kb = jax.random.split(k)
        bound = 1.0 / math.sqrt(fan_in)
        w = jax.random.uniform(kw, (fan_out, fan_in), jnp.float32, -bound, bound)
        b = jax.random.uniform(kb, (fan_out,), jnp.float32, -bound, bound)
        return w, b

    w_in, b_in = lin(keys[0], 1, dim)              # Linear(1, dim)
    tw1, tb1 = lin(keys[1], dim, time_dim)         # Linear(dim, 4*dim)
    tw2, tb2 = lin(keys[2], time_dim, dim)         # Linear(4*dim, dim)
    w1, b1 = lin(keys[3], dim, dim)
    w2, b2 = lin(keys[4], dim, dim)
    w3, b3 = lin(keys[5], dim, dim)
    w_out, b_out = lin(keys[6], dim, 1)            # Linear(dim, 1)

    return dict(freqs=freqs, w_in=w_in, b_in=b_in, tw1=tw1, tb1=tb1, tw2=tw2, tb2=tb2,
                w1=w1, b1=b1, w2=w2, b2=b2, w3=w3, b3=b3, w_out=w_out, b_out=b_out)


def pack_params(p, dim=DIM):
    """Pack all parameters into one pre-padded (SLAB_ROWS, 128) f32 slab."""
    time_dim = dim * 4
    half = dim // 2
    slab = np.zeros((SLAB_ROWS, SLAB_LANES), np.float32)
    slab[TW1_R0:TW1_R0 + time_dim, :dim] = np.asarray(p["tw1"])
    slab[TW2_R0:TW2_R0 + dim, :time_dim] = np.asarray(p["tw2"])
    slab[W1_R0:W1_R0 + dim, :dim] = np.asarray(p["w1"])
    slab[W2_R0:W2_R0 + dim, :dim] = np.asarray(p["w2"])
    slab[W3_R0:W3_R0 + dim, :dim] = np.asarray(p["w3"])

    vec = np.zeros((dim, SLAB_LANES), np.float32)
    vec[:, L_WIN] = np.asarray(p["w_in"]).reshape(dim)
    vec[:, L_BIN] = np.asarray(p["b_in"])
    freqs = np.asarray(p["freqs"])
    vec[:, L_FREQ] = np.concatenate([freqs, freqs])
    vec[:, L_PHASE] = np.concatenate([np.zeros(half, np.float32),
                                      np.full(half, np.pi / 2, np.float32)])
    vec[:, L_TB2] = np.asarray(p["tb2"])
    vec[:, L_B1] = np.asarray(p["b1"])
    vec[:, L_B2] = np.asarray(p["b2"])
    vec[:, L_B3] = np.asarray(p["b3"])
    vec[:, L_WOUT] = np.asarray(p["w_out"]).reshape(dim)
    vec[0, L_BOUT] = float(np.asarray(p["b_out"]).reshape(()))
    slab[VEC_R0:VEC_R0 + dim, :] = vec

    slab[TB1_R0:TB1_R0 + time_dim, 0] = np.asarray(p["tb1"])
    return jnp.asarray(slab)


# -------------------------------- reference --------------------------------
def reference(x_t, t, p, approximate, dot_dtype=jnp.float32):
    """Plain-JAX reference replicating the PyTorch forward.
    approximate=False + dot_dtype=f32  -> exact erf-GELU / full-precision semantics.
    approximate=True  + dot_dtype=bf16 -> mirrors the kernel numerics (tight check)."""
    B = x_t.shape[0]

    def dd(a, b):
        return jnp.dot(a.astype(dot_dtype), b.astype(dot_dtype),
                       preferred_element_type=jnp.float32,
                       precision=jax.lax.Precision.HIGHEST)

    x = x_t.reshape(B, 1).astype(jnp.float32)
    h = x * p["w_in"].reshape(1, -1) + p["b_in"]                       # Linear(1, dim)
    arg = t.reshape(B, 1).astype(jnp.float32) * p["freqs"][None, :]
    emb = jnp.concatenate([jnp.sin(arg), jnp.cos(arg)], axis=-1)
    g = dd(emb, p["tw1"].T) + p["tb1"]
    g = jax.nn.gelu(g, approximate=approximate)
    temb = dd(g, p["tw2"].T) + p["tb2"]
    h = jax.nn.gelu(h + temb, approximate=approximate)
    for wk, bk in (("w1", "b1"), ("w2", "b2"), ("w3", "b3")):
        h = jax.nn.gelu(dd(h, p[wk].T) + p[bk], approximate=approximate)
    out = jnp.sum(h * p["w_out"].reshape(1, -1), axis=-1,
                  keepdims=True) + p["b_out"]                          # Linear(dim, 1)
    return out.reshape(B, 1, 1, 1)


if __name__ == "__main__":
    key = jax.random.PRNGKey(0)
    kx, kt, kp = jax.random.split(key, 3)
    params = init_params(kp)
    slab = pack_params(params)

    # small case (single grid tile)
    B = 8
    x_t = jax.random.normal(kx, (B, 1, 1, 1), jnp.float32)          # NCHW (B,1,1,1)
    t = jax.random.uniform(kt, (B,), jnp.float32, 0.0, 1000.0)      # diffusion timestep
    out = jax.block_until_ready(one_d_model_forward(x_t, t, slab))
    assert out.shape == (B, 1, 1, 1)
    # tight check vs a reference mirroring kernel numerics (tanh GELU, bf16 MXU operands)
    np.testing.assert_allclose(
        np.asarray(out),
        np.asarray(reference(x_t, t, params, approximate=True, dot_dtype=jnp.bfloat16)),
        rtol=2e-3, atol=1e-3)
    # semantic sanity check vs the exact erf-GELU / f32 PyTorch reference
    # (tanh-GELU + bf16-MXU approximations account for the ~1e-2 slack)
    np.testing.assert_allclose(
        np.asarray(out),
        np.asarray(reference(x_t, t, params, approximate=False, dot_dtype=jnp.float32)),
        rtol=3e-2, atol=1.5e-2)

    # medium case: exercises the 2-tile batch grid (tile capped so v7x gets 2 steps)
    B2 = 300
    kx2, kt2 = jax.random.split(jax.random.PRNGKey(1))
    x_t2 = jax.random.normal(kx2, (B2, 1, 1, 1), jnp.float32)
    t2 = jax.random.uniform(kt2, (B2,), jnp.float32, 0.0, 1000.0)
    out2 = jax.block_until_ready(one_d_model_forward(x_t2, t2, slab))
    assert out2.shape == (B2, 1, 1, 1)
    np.testing.assert_allclose(
        np.asarray(out2),
        np.asarray(reference(x_t2, t2, params, approximate=True, dot_dtype=jnp.bfloat16)),
        rtol=2e-3, atol=1e-3)

    # larger case: exercises full-size TILE_B tiles plus a padded tail
    B3 = 2500
    kx3, kt3 = jax.random.split(jax.random.PRNGKey(2))
    x_t3 = jax.random.normal(kx3, (B3, 1, 1, 1), jnp.float32)
    t3 = jax.random.uniform(kt3, (B3,), jnp.float32, 0.0, 1000.0)
    out3 = jax.block_until_ready(one_d_model_forward(x_t3, t3, slab))
    assert out3.shape == (B3, 1, 1, 1)
    np.testing.assert_allclose(
        np.asarray(out3),
        np.asarray(reference(x_t3, t3, params, approximate=True, dot_dtype=jnp.bfloat16)),
        rtol=2e-3, atol=1e-3)

    print("KERNEL_OK")
</pallas_src>

<mosaic_0001>
module attributes {stable_mosaic.version = 11 : i64} {
  func.func @one_d_kernel(%arg0: i32, %arg1: memref<2x128xf32, #tpu.memory_space<vmem>>, %arg2: memref<208x128xf32, #tpu.memory_space<vmem>>, %arg3: memref<1x128xf32, #tpu.memory_space<vmem>>) attributes {dimension_semantics = [#tpu.dimension_semantics<parallel>], iteration_bounds = array<i64: 1>, scalar_prefetch = 0 : i64, scratch_operands = 0 : i64, tpu.core_type = #tpu.core_type<tc>, window_params = [{transform_indices = @transform_0, window_bounds = array<i64: 2, 128>}, {pipeline_mode = #tpu.pipeline_mode<synchronous>, transform_indices = @transform_1, window_bounds = array<i64: 208, 128>}, {transform_indices = @transform_2, window_bounds = array<i64: 1, 128>}]} {
    %c0 = arith.constant 0 : index
    %c0_0 = arith.constant 0 : index
    %0 = vector.load %arg1[%c0, %c0_0] : memref<2x128xf32, #tpu.memory_space<vmem>>, vector<1x128xf32>
    %c1 = arith.constant 1 : index
    %c0_1 = arith.constant 0 : index
    %1 = vector.load %arg1[%c1, %c0_1] : memref<2x128xf32, #tpu.memory_space<vmem>>, vector<1x128xf32>
    %c128 = arith.constant 128 : index
    %c0_2 = arith.constant 0 : index
    %2 = vector.load %arg2[%c128, %c0_2] : memref<208x128xf32, #tpu.memory_space<vmem>>, vector<16x1xf32>
    %c128_3 = arith.constant 128 : index
    %c1_4 = arith.constant 1 : index
    %3 = vector.load %arg2[%c128_3, %c1_4] : memref<208x128xf32, #tpu.memory_space<vmem>>, vector<16x1xf32>
    %c128_5 = arith.constant 128 : index
    %c2 = arith.constant 2 : index
    %4 = vector.load %arg2[%c128_5, %c2] : memref<208x128xf32, #tpu.memory_space<vmem>>, vector<16x1xf32>
    %c128_6 = arith.constant 128 : index
    %c3 = arith.constant 3 : index
    %5 = vector.load %arg2[%c128_6, %c3] : memref<208x128xf32, #tpu.memory_space<vmem>>, vector<16x1xf32>
    %c128_7 = arith.constant 128 : index
    %c4 = arith.constant 4 : index
    %6 = vector.load %arg2[%c128_7, %c4] : memref<208x128xf32, #tpu.memory_space<vmem>>, vector<16x1xf32>
    %c128_8 = arith.constant 128 : index
    %c5 = arith.constant 5 : index
    %7 = vector.load %arg2[%c128_8, %c5] : memref<208x128xf32, #tpu.memory_space<vmem>>, vector<16x1xf32>
    %c128_9 = arith.constant 128 : index
    %c6 = arith.constant 6 : index
    %8 = vector.load %arg2[%c128_9, %c6] : memref<208x128xf32, #tpu.memory_space<vmem>>, vector<16x1xf32>
    %c128_10 = arith.constant 128 : index
    %c7 = arith.constant 7 : index
    %9 = vector.load %arg2[%c128_10, %c7] : memref<208x128xf32, #tpu.memory_space<vmem>>, vector<16x1xf32>
    %c128_11 = arith.constant 128 : index
    %c8 = arith.constant 8 : index
    %10 = vector.load %arg2[%c128_11, %c8] : memref<208x128xf32, #tpu.memory_space<vmem>>, vector<16x1xf32>
    %c128_12 = arith.constant 128 : index
    %c9 = arith.constant 9 : index
    %11 = vector.load %arg2[%c128_12, %c9] : memref<208x128xf32, #tpu.memory_space<vmem>>, vector<1x1xf32>
    %12 = vector.broadcast %2 : vector<16x1xf32> to vector<16x128xf32>
    %13 = vector.broadcast %0 : vector<1x128xf32> to vector<16x128xf32>
    %14 = arith.mulf %12, %13 : vector<16x128xf32>
    %15 = vector.broadcast %3 : vector<16x1xf32> to vector<16x128xf32>
    %16 = arith.addf %14, %15 : vector<16x128xf32>
    %17 = vector.broadcast %4 : vector<16x1xf32> to vector<16x128xf32>
    %18 = vector.broadcast %1 : vector<1x128xf32> to vector<16x128xf32>
    %19 = arith.mulf %17, %18 : vector<16x128xf32>
    %20 = vector.broadcast %5 : vector<16x1xf32> to vector<16x128xf32>
    %21 = arith.addf %19, %20 : vector<16x128xf32>
    %22 = math.sin %21 : vector<16x128xf32>
    %c0_13 = arith.constant 0 : index
    %c0_14 = arith.constant 0 : index
    %23 = vector.load %arg2[%c0_13, %c0_14] : memref<208x128xf32, #tpu.memory_space<vmem>>, vector<64x16xf32>
    %24 = arith.truncf %23 : vector<64x16xf32> to vector<64x16xbf16>
    %c144 = arith.constant 144 : index
    %c0_15 = arith.constant 0 : index
    %25 = vector.load %arg2[%c144, %c0_15] : memref<208x128xf32, #tpu.memory_space<vmem>>, vector<64x1xf32>
    %26 = arith.truncf %22 : vector<16x128xf32> to vector<16x128xbf16>
    %cst = arith.constant dense<0.000000e+00> : vector<64x128xf32>
    %27 = tpu.matmul %24, %26, %cst {dimension_numbers = #tpu.dot_dimension_numbers<[1], [0], [0], [1], [0, 0, 1, 1], [], []>} : vector<64x16xbf16>, vector<16x128xbf16>, vector<64x128xf32> -> vector<64x128xf32>
    %28 = vector.broadcast %25 : vector<64x1xf32> to vector<64x128xf32>
    %29 = arith.addf %27, %28 : vector<64x128xf32>
    %cst_16 = arith.constant 5.000000e-01 : f32
    %30 = vector.broadcast %cst_16 : f32 to vector<64x128xf32>
    %31 = arith.mulf %30, %29 : vector<64x128xf32>
    %cst_17 = arith.constant 4.471500e-02 : f32
    %32 = vector.broadcast %cst_17 : f32 to vector<64x128xf32>
    %33 = arith.mulf %32, %29 : vector<64x128xf32>
    %34 = arith.mulf %33, %29 : vector<64x128xf32>
    %35 = arith.mulf %34, %29 : vector<64x128xf32>
    %36 = arith.addf %29, %35 : vector<64x128xf32>
    %cst_18 = arith.constant 0.797884583 : f32
    %37 = vector.broadcast %cst_18 : f32 to vector<64x128xf32>
    %38 = arith.mulf %37, %36 : vector<64x128xf32>
    %39 = math.tanh %38 : vector<64x128xf32>
    %cst_19 = arith.constant 1.000000e+00 : f32
    %40 = vector.broadcast %cst_19 : f32 to vector<64x128xf32>
    %41 = arith.addf %40, %39 : vector<64x128xf32>
    %42 = arith.mulf %31, %41 : vector<64x128xf32>
    %c64 = arith.constant 64 : index
    %c0_20 = arith.constant 0 : index
    %43 = vector.load %arg2[%c64, %c0_20] : memref<208x128xf32, #tpu.memory_space<vmem>>, vector<16x64xf32>
    %44 = arith.truncf %43 : vector<16x64xf32> to vector<16x64xbf16>
    %45 = arith.truncf %42 : vector<64x128xf32> to vector<64x128xbf16>
    %cst_21 = arith.constant dense<0.000000e+00> : vector<16x128xf32>
    %46 = tpu.matmul %44, %45, %cst_21 {dimension_numbers = #tpu.dot_dimension_numbers<[1], [0], [0], [1], [0, 0, 1, 1], [], []>} : vector<16x64xbf16>, vector<64x128xbf16>, vector<16x128xf32> -> vector<16x128xf32>
    %47 = vector.broadcast %6 : vector<16x1xf32> to vector<16x128xf32>
    %48 = arith.addf %46, %47 : vector<16x128xf32>
    %49 = arith.addf %16, %48 : vector<16x128xf32>
    %cst_22 = arith.constant 5.000000e-01 : f32
    %50 = vector.broadcast %cst_22 : f32 to vector<16x128xf32>
    %51 = arith.mulf %50, %49 : vector<16x128xf32>
    %cst_23 = arith.constant 4.471500e-02 : f32
    %52 = vector.broadcast %cst_23 : f32 to vector<16x128xf32>
    %53 = arith.mulf %52, %49 : vector<16x128xf32>
    %54 = arith.mulf %53, %49 : vector<16x128xf32>
    %55 = arith.mulf %54, %49 : vector<16x128xf32>
    %56 = arith.addf %49, %55 : vector<16x128xf32>
    %cst_24 = arith.constant 0.797884583 : f32
    %57 = vector.broadcast %cst_24 : f32 to vector<16x128xf32>
    %58 = arith.mulf %57, %56 : vector<16x128xf32>
    %59 = math.tanh %58 : vector<16x128xf32>
    %cst_25 = arith.constant 1.000000e+00 : f32
    %60 = vector.broadcast %cst_25 : f32 to vector<16x128xf32>
    %61 = arith.addf %60, %59 : vector<16x128xf32>
    %62 = arith.mulf %51, %61 : vector<16x128xf32>
    %c80 = arith.constant 80 : index
    %c0_26 = arith.constant 0 : index
    %63 = vector.load %arg2[%c80, %c0_26] : memref<208x128xf32, #tpu.memory_space<vmem>>, vector<16x16xf32>
    %64 = arith.truncf %63 : vector<16x16xf32> to vector<16x16xbf16>
    %65 = arith.truncf %62 : vector<16x128xf32> to vector<16x128xbf16>
    %cst_27 = arith.constant dense<0.000000e+00> : vector<16x128xf32>
    %66 = tpu.matmul %64, %65, %cst_27 {dimension_numbers = #tpu.dot_dimension_numbers<[1], [0], [0], [1], [0, 0, 1, 1], [], []>} : vector<16x16xbf16>, vector<16x128xbf16>, vector<16x128xf32> -> vector<16x128xf32>
    %67 = vector.broadcast %7 : vector<16x1xf32> to vector<16x128xf32>
    %68 = arith.addf %66, %67 : vector<16x128xf32>
    %cst_28 = arith.constant 5.000000e-01 : f32
    %69 = vector.broadcast %cst_28 : f32 to vector<16x128xf32>
    %70 = arith.mulf %69, %68 : vector<16x128xf32>
    %cst_29 = arith.constant 4.471500e-02 : f32
    %71 = vector.broadcast %cst_29 : f32 to vector<16x128xf32>
    %72 = arith.mulf %71, %68 : vector<16x128xf32>
    %73 = arith.mulf %72, %68 : vector<16x128xf32>
    %74 = arith.mulf %73, %68 : vector<16x128xf32>
    %75 = arith.addf %68, %74 : vector<16x128xf32>
    %cst_30 = arith.constant 0.797884583 : f32
    %76 = vector.broadcast %cst_30 : f32 to vector<16x128xf32>
    %77 = arith.mulf %76, %75 : vector<16x128xf32>
    %78 = math.tanh %77 : vector<16x128xf32>
    %cst_31 = arith.constant 1.000000e+00 : f32
    %79 = vector.broadcast %cst_31 : f32 to vector<16x128xf32>
    %80 = arith.addf %79, %78 : vector<16x128xf32>
    %81 = arith.mulf %70, %80 : vector<16x128xf32>
    %c96 = arith.constant 96 : index
    %c0_32 = arith.constant 0 : index
    %82 = vector.load %arg2[%c96, %c0_32] : memref<208x128xf32, #tpu.memory_space<vmem>>, vector<16x16xf32>
    %83 = arith.truncf %82 : vector<16x16xf32> to vector<16x16xbf16>
    %84 = arith.truncf %81 : vector<16x128xf32> to vector<16x128xbf16>
    %cst_33 = arith.constant dense<0.000000e+00> : vector<16x128xf32>
    %85 = tpu.matmul %83, %84, %cst_33 {dimension_numbers = #tpu.dot_dimension_numbers<[1], [0], [0], [1], [0, 0, 1, 1], [], []>} : vector<16x16xbf16>, vector<16x128xbf16>, vector<16x128xf32> -> vector<16x128xf32>
    %86 = vector.broadcast %8 : vector<16x1xf32> to vector<16x128xf32>
    %87 = arith.addf %85, %86 : vector<16x128xf32>
    %cst_34 = arith.constant 5.000000e-01 : f32
    %88 = vector.broadcast %cst_34 : f32 to vector<16x128xf32>
    %89 = arith.mulf %88, %87 : vector<16x128xf32>
    %cst_35 = arith.constant 4.471500e-02 : f32
    %90 = vector.broadcast %cst_35 : f32 to vector<16x128xf32>
    %91 = arith.mulf %90, %87 : vector<16x128xf32>
    %92 = arith.mulf %91, %87 : vector<16x128xf32>
    %93 = arith.mulf %92, %87 : vector<16x128xf32>
    %94 = arith.addf %87, %93 : vector<16x128xf32>
    %cst_36 = arith.constant 0.797884583 : f32
    %95 = vector.broadcast %cst_36 : f32 to vector<16x128xf32>
    %96 = arith.mulf %95, %94 : vector<16x128xf32>
    %97 = math.tanh %96 : vector<16x128xf32>
    %cst_37 = arith.constant 1.000000e+00 : f32
    %98 = vector.broadcast %cst_37 : f32 to vector<16x128xf32>
    %99 = arith.addf %98, %97 : vector<16x128xf32>
    %100 = arith.mulf %89, %99 : vector<16x128xf32>
    %c112 = arith.constant 112 : index
    %c0_38 = arith.constant 0 : index
    %101 = vector.load %arg2[%c112, %c0_38] : memref<208x128xf32, #tpu.memory_space<vmem>>, vector<16x16xf32>
    %102 = arith.truncf %101 : vector<16x16xf32> to vector<16x16xbf16>
    %103 = arith.truncf %100 : vector<16x128xf32> to vector<16x128xbf16>
    %cst_39 = arith.constant dense<0.000000e+00> : vector<16x128xf32>
    %104 = tpu.matmul %102, %103, %cst_39 {dimension_numbers = #tpu.dot_dimension_numbers<[1], [0], [0], [1], [0, 0, 1, 1], [], []>} : vector<16x16xbf16>, vector<16x128xbf16>, vector<16x128xf32> -> vector<16x128xf32>
    %105 = vector.broadcast %9 : vector<16x1xf32> to vector<16x128xf32>
    %106 = arith.addf %104, %105 : vector<16x128xf32>
    %cst_40 = arith.constant 5.000000e-01 : f32
    %107 = vector.broadcast %cst_40 : f32 to vector<16x128xf32>
    %108 = arith.mulf %107, %106 : vector<16x128xf32>
    %cst_41 = arith.constant 4.471500e-02 : f32
    %109 = vector.broadcast %cst_41 : f32 to vector<16x128xf32>
    %110 = arith.mulf %109, %106 : vector<16x128xf32>
    %111 = arith.mulf %110, %106 : vector<16x128xf32>
    %112 = arith.mulf %111, %106 : vector<16x128xf32>
    %113 = arith.addf %106, %112 : vector<16x128xf32>
    %cst_42 = arith.constant 0.797884583 : f32
    %114 = vector.broadcast %cst_42 : f32 to vector<16x128xf32>
    %115 = arith.mulf %114, %113 : vector<16x128xf32>
    %116 = math.tanh %115 : vector<16x128xf32>
    %cst_43 = arith.constant 1.000000e+00 : f32
    %117 = vector.broadcast %cst_43 : f32 to vector<16x128xf32>
    %118 = arith.addf %117, %116 : vector<16x128xf32>
    %119 = arith.mulf %108, %118 : vector<16x128xf32>
    %120 = vector.broadcast %10 : vector<16x1xf32> to vector<16x128xf32>
    %121 = arith.mulf %119, %120 : vector<16x128xf32>
    %cst_44 = arith.constant dense<0.000000e+00> : vector<128xf32>
    %122 = vector.multi_reduction <add>, %121, %cst_44 [0] : vector<16x128xf32> to vector<128xf32>
    %123 = vector.shape_cast %122 : vector<128xf32> to vector<1x128xf32>
    %124 = vector.broadcast %11 : vector<1x1xf32> to vector<1x128xf32>
    %125 = arith.addf %123, %124 : vector<1x128xf32>
    %c0_45 = arith.constant 0 : index
    %c0_46 = arith.constant 0 : index
    %126 = vector.load %arg3[%c0_45, %c0_46] : memref<1x128xf32, #tpu.memory_space<vmem>>, vector<1x128xf32>
    tpu.vector_store %arg3[%c0_45, %c0_46], %125 {strides = array<i32>} : memref<1x128xf32, #tpu.memory_space<vmem>>, vector<1x128xf32>,
    return
  }
  func.func @transform_0(%arg0: i32) -> (i32, i32) {
    %c0_i32 = arith.constant 0 : i32
    %c0_i32_0 = arith.constant 0 : i32
    return %c0_i32, %arg0 : i32, i32
  }
  func.func @transform_1(%arg0: i32) -> (i32, i32) {
    %c0_i32 = arith.constant 0 : i32
    %c0_i32_0 = arith.constant 0 : i32
    %c0_i32_1 = arith.constant 0 : i32
    return %c0_i32, %c0_i32_0 : i32, i32
  }
  func.func @transform_2(%arg0: i32) -> (i32, i32) {
    %c0_i32 = arith.constant 0 : i32
    %c0_i32_0 = arith.constant 0 : i32
    return %c0_i32, %arg0 : i32, i32
  }
}

</mosaic_0001>

<llo_original>
// kernel: tpu_custom_call.1
$region0: #{tpu_custom_call.1}
  #allocation0 [shape = 'u32[]', space=smem, size = 0x4, offset = 0x4, fixed_abs, tag = 'smem constant byte address 0x4 - core index']
  #allocation1 [shape = 'u32[144,128]{1,0:T(1,128)}', space=vmem, size = 0x12000, scoped, tag = 'internal scratch']
  %s0 = inlined_call_operand.hbm [shape: f32[2,128], index: 0, kind: input, shape index: {}]
  %s1 = inlined_call_operand.hbm [shape: f32[208,128], index: 1, kind: input, shape index: {}]
  %s2 = inlined_call_operand.hbm [shape: f32[1,128], index: 2, kind: output, shape index: {}]
  %s3 = sld [smem:[#allocation0]]
  $region26: #{tpu_custom_call.1} parent=0
    _
  %s5 = ssub.s32 1, %s3
  %s6 = scalar_select 0, %s5, %s3
  $region1: #{tpu_custom_call.1} parent=0
    #allocation2 [shape = 'u8[1024]{0}', space=vmem, size = 0x400, scoped, tag = 'input window, operand 0, single buffered']
    #allocation3 [shape = 's32[1]{0}', space=sflag, size = 0x4, scoped, tag = 'scoped memory for tpu_custom_call.1']
    #allocation4 [shape = 's32[1]{0}', space=sflag, size = 0x4, scoped, tag = 'scoped memory for tpu_custom_call.1']
    #allocation5 [shape = 'u8[106496]{0}', space=vmem, size = 0x1a000, scoped, tag = 'input window, operand 1, single buffered']
    #allocation6 [shape = 's32[1]{0}', space=sflag, size = 0x4, scoped, tag = 'scoped memory for tpu_custom_call.1']
    #allocation7 [shape = 'u8[512]{0}', space=vmem, size = 0x400, scoped, tag = 'output window, operand 0, single buffered']
    %7 = vsyncpa [#allocation3], 0
    %8 = vsyncpa [#allocation6], 0
    %9 = vsyncpa [#allocation4], 0
    // Predicated region
    $region2: #{tpu_custom_call.1} parent=1 // pred_check
      _
    $region3: #{tpu_custom_call.1} parent=1 // pred_check_branch
      %11 = sbr.rel (0) target = $region5
    $region4: #{tpu_custom_call.1} parent=1 // pred_region
      %s13 = ssub.s32 32, 32
      %14 = vsyncadd [#allocation3], %s13
      %s16 = sshll.u32 [#allocation2], 4
      %s17 = int_to_ptr.vmem [resolvable:$true] %s16
      %19 = dma.hbm_to_vmem [thread:$0]  %s0, 32, %s17, [#allocation3]
    $region5: #{tpu_custom_call.1} parent=1 // pred_fallthru
      _
    // Predicated region
    $region6: #{tpu_custom_call.1} parent=1 // pred_check
      _
    $region7: #{tpu_custom_call.1} parent=1 // pred_check_branch
      %21 = sbr.rel (0) target = $region9
    $region8: #{tpu_custom_call.1} parent=1 // pred_region
      %s23 = ssub.s32 3328, 3328
      %24 = vsyncadd [#allocation6], %s23
      %s25 = sshll.u32 [#allocation5], 4
      %s26 = int_to_ptr.vmem [resolvable:$true] %s25
      %31 = dma.hbm_to_vmem [thread:$0]  %s1, 3328, %s26, [#allocation6], 128, 128, 8
    $region9: #{tpu_custom_call.1} parent=1 // pred_fallthru
      _
    // Predicated region
    $region10: #{tpu_custom_call.1} parent=1 // pred_check
      _
    $region11: #{tpu_custom_call.1} parent=1 // pred_check_branch
      %33 = sbr.rel (0) target = $region13
    $region12: #{tpu_custom_call.1} parent=1 // pred_region
      %34 = dma.done [#allocation3], 32
    $region13: #{tpu_custom_call.1} parent=1 // pred_fallthru
      _
    // Predicated region
    $region14: #{tpu_custom_call.1} parent=1 // pred_check
      _
    $region15: #{tpu_custom_call.1} parent=1 // pred_check_branch
      %36 = sbr.rel (0) target = $region17
    $region16: #{tpu_custom_call.1} parent=1 // pred_region
      %37 = dma.done [#allocation6], 3328
    $region17: #{tpu_custom_call.1} parent=1 // pred_fallthru
      _
    %v39 = vld [vmem:[#allocation2] sm:$0x1]
    %v40 = vld [vmem:[#allocation2 + $0x1] sm:$0x1]
    %v41 = vld [vmem:[#allocation5 + $0x80] sm:$0xff]
    %v42 = vld [vmem:[#allocation5 + $0x88] sm:$0xff]
    %v43 = vld [vmem:[#allocation5 + $0x80] sm:$0x1]
    %45 = vset.pattern.permute.xlu0 0
    %46 = vperm.xlu0 %45, %v41
    %v47 = vpop.permute.xlu0 %46
    %50 = vset.pattern.permute.xlu0 0
    %51 = vperm.xlu0 %50, %v42
    %v52 = vpop.permute.xlu0 %51
    %v54 = vlaneseq
    %v55 = vshrl.u32 %v54, 7
    %v56 = vsub.s32 0, %v55
    %v57 = vrot.slane %v39, %v56
    %v58 = vmul.f32 %v47, %v57
    %v59 = vmul.f32 %v52, %v57
    %60 = vset.pattern.permute.xlu0 1
    %61 = vperm.xlu0 %60, %v41
    %v62 = vpop.permute.xlu0 %61
    %64 = vset.pattern.permute.xlu0 1
    %65 = vperm.xlu0 %64, %v42
    %v66 = vpop.permute.xlu0 %65
    %v68 = vadd.f32 %v58, %v62
    %v69 = vadd.f32 %v59, %v66
    %70 = vset.pattern.permute.xlu0 2
    %71 = vperm.xlu0 %70, %v41
    %v72 = vpop.permute.xlu0 %71
    %74 = vset.pattern.permute.xlu0 2
    %75 = vperm.xlu0 %74, %v42
    %v76 = vpop.permute.xlu0 %75
    %v78 = vlaneseq
    %v79 = vshrl.u32 %v78, 7
    %v80 = vsub.s32 0, %v79
    %v81 = vrot.slane %v40, %v80
    %v82 = vmul.f32 %v72, %v81
    %v83 = vmul.f32 %v76, %v81
    %84 = vset.pattern.permute.xlu0 3
    %85 = vperm.xlu0 %84, %v41
    %v86 = vpop.permute.xlu0 %85
    %88 = vset.pattern.permute.xlu0 3
    %89 = vperm.xlu0 %88, %v42
    %v90 = vpop.permute.xlu0 %89
    %v92 = vadd.f32 %v82, %v86
    %v93 = vadd.f32 %v83, %v90
    %v94 = vand.u32 2147483647, %v92
    %vm95 = vcmp.le.f32.partialorder %v94, 0.7853982
    %vm96 = vcmp.lt.s32.totalorder %v92, 0
    %v97 = vand.u32 %v92, 2139095040
    %v98 = vshrl.u32 %v97, 23
    %v99 = vsub.s32 %v98, 127
    %v100 = vand.u32 2147483647, %v92
    %v101 = vand.u32 %v100, 8388607
    %v102 = vor.u32 %v101, 8388608
    %v103 = vsub.s32 0, %v102
    %v104 = vadd.s32 %v99, 1
    %vm105 = vcmp.gt.s32.totalorder %v104, 0
    %v106 = vsel %vm105, %v104, 0
    %v107 = vshrl.u32 %v106, 5
    %v108 = vand.u32 %v106, 31
    %v109 = vsub.s32 32, %v108
    %v110 = vshrl.u32 683565275, %v109
    %v111 = vshll.u32 683565275, %v108
    %v112 = vshrl.u32 2475754826, %v109
    %v113 = vor.u32 %v111, %v112
    %v114 = vshll.u32 2475754826, %v108
    %v115 = vshrl.u32 2131351028, %v109
    %v116 = vor.u32 %v114, %v115
    %v117 = vshll.u32 2131351028, %v108
    %v118 = vshrl.u32 2102212464, %v109
    %v119 = vor.u32 %v117, %v118
    %v120 = vshll.u32 2102212464, %v108
    %v121 = vshrl.u32 920167782, %v109
    %v122 = vor.u32 %v120, %v121
    %v123 = vshll.u32 920167782, %v108
    %v124 = vshrl.u32 1326507024, %v109
    %v125 = vor.u32 %v123, %v124
    %vm126 = vcmp.lt.s32.totalorder %v107, 1
    %vm127 = vcmp.lt.s32.totalorder %v107, 2
    %vm128 = vcmp.lt.s32.totalorder %v107, 3
    %vm129 = vcmp.lt.s32.totalorder %v107, 4
    %v130 = vsel %vm126, %v110, %v113
    %v131 = vsel %vm129, %v119, 2102212464
    %v132 = vsel %vm128, %v116, %v131
    %v133 = vsel %vm127, %v130, %v132
    %v134 = vsel %vm126, %v113, %v116
    %v135 = vsel %vm129, %v122, 920167782
    %v136 = vsel %vm128, %v119, %v135
    %v137 = vsel %vm127, %v134, %v136
    %v138 = vsel %vm126, %v116, %v119
    %v139 = vsel %vm129, %v125, 1326507024
    %v140 = vsel %vm128, %v122, %v139
    %v141 = vsel %vm127, %v138, %v140
    %v142 = vshll.u32 %v102, 8
    %v143 = vmul.u32.u64.compose %v142, %v141
    %v144 = vextract.low.u32 %v143
    %v145 = vextract.high.u32 %v143
    %v146 = vmul.u32.u64.compose %v142, %v137
    %v147 = vextract.low.u32 %v146
    %v148 = vextract.high.u32 %v146
    %v149 = vmul.u32 %v142, %v133
    %v150 = vadd.s32 %v145, %v147
    %vm151 = vc.u32 %v145, %v147
    %v152 = vadd.s32 %v148, 1
    %v153 = vsel %vm151, %v152, %v148
    %v154 = vadd.s32 %v149, %v153
    %v155 = vadd.s32 %v154, 536870912
    %v156 = vshrl.u32 %v155, 30
    %v157 = vshll.u32 %v156, 30
    %v158 = vsub.s32 %v154, %v157
    %vm159 = vcmp.lt.s32.totalorder %v158, 0
    %v160 = vsub.s32 0, %v158
    %v161 = vsel %vm159, %v160, %v158
    %v162 = vclz %v161
    %v163 = vsub.s32 %v162, 2
    %vm164 = vcmp.gt.s32.totalorder 0, %v163
    %v165 = vsel %vm164, 0, %v163
    %v166 = vsub.s32 32, %v165
    %v167 = vshll.u32 %v158, %v165
    %v168 = vshrl.u32 %v150, %v166
    %v169 = vor.u32 %v167, %v168
    %v170 = vsub.s32 4294967266, %v165
    %v171 = vadd.s32 %v170, 127
    %v172 = vshll.u32 %v171, 23
    %v173 = vor.u32 4788187, %v172
    %v174 = vand.u32 2147483647, %v173
    %v176 = vcvt.s32.f32 %v169
    %v177 = vmul.f32 %v176, %v174
    %v178 = vxor.u32 %v177, 2147483648
    %v179 = vsel %vm96, %v178, %v177
    %v180 = vsub.s32 4, %v156
    %v181 = vsel %vm96, %v180, %v156
    %v182 = vsel %vm95, %v92, %v179
    %v183 = vsel %vm95, 0, %v181
    %v184 = vcosq.f32.pop %v182
    %v185 = vsinq.f32.pop %v182
    %vm186 = vweird.f32 %v92
    %v187 = vadd.s32 %v183, 3
    %v188 = vand.u32 %v187, 3
    %vm189 = vcmp.lt.s32.totalorder %v188, 2
    %vm190 = vcmp.eq.s32.totalorder %v188, 0
    %v191 = vxor.u32 %v185, 2147483648
    %v192 = vsel %vm190, %v184, %v191
    %vm193 = vcmp.eq.s32.totalorder %v188, 2
    %v194 = vxor.u32 %v184, 2147483648
    %v195 = vsel %vm193, %v194, %v185
    %v196 = vsel %vm189, %v192, %v195
    %v197 = vsel %vm186, nan, %v196
    %v198 = vand.u32 2147483647, %v93
    %vm199 = vcmp.le.f32.partialorder %v198, 0.7853982
    %vm200 = vcmp.lt.s32.totalorder %v93, 0
    %v201 = vand.u32 %v93, 2139095040
    %v202 = vshrl.u32 %v201, 23
    %v203 = vsub.s32 %v202, 127
    %v204 = vand.u32 2147483647, %v93
    %v205 = vand.u32 %v204, 8388607
    %v206 = vor.u32 %v205, 8388608
    %v207 = vsub.s32 0, %v206
    %v208 = vadd.s32 %v203, 1
    %vm209 = vcmp.gt.s32.totalorder %v208, 0
    %v210 = vsel %vm209, %v208, 0
    %v211 = vshrl.u32 %v210, 5
    %v212 = vand.u32 %v210, 31
    %v213 = vsub.s32 32, %v212
    %v214 = vshrl.u32 683565275, %v213
    %v215 = vshll.u32 683565275, %v212
    %v216 = vshrl.u32 2475754826, %v213
    %v217 = vor.u32 %v215, %v216
    %v218 = vshll.u32 2475754826, %v212
    %v219 = vshrl.u32 2131351028, %v213
    %v220 = vor.u32 %v218, %v219
    %v221 = vshll.u32 2131351028, %v212
    %v222 = vshrl.u32 2102212464, %v213
    %v223 = vor.u32 %v221, %v222
    %v224 = vshll.u32 2102212464, %v212
    %v225 = vshrl.u32 920167782, %v213
    %v226 = vor.u32 %v224, %v225
    %v227 = vshll.u32 920167782, %v212
    %v228 = vshrl.u32 1326507024, %v213
    %v229 = vor.u32 %v227, %v228
    %vm230 = vcmp.lt.s32.totalorder %v211, 1
    %vm231 = vcmp.lt.s32.totalorder %v211, 2
    %vm232 = vcmp.lt.s32.totalorder %v211, 3
    %vm233 = vcmp.lt.s32.totalorder %v211, 4
    %v234 = vsel %vm230, %v214, %v217
    %v235 = vsel %vm233, %v223, 2102212464
    %v236 = vsel %vm232, %v220, %v235
    %v237 = vsel %vm231, %v234, %v236
    %v238 = vsel %vm230, %v217, %v220
    %v239 = vsel %vm233, %v226, 920167782
    %v240 = vsel %vm232, %v223, %v239
    %v241 = vsel %vm231, %v238, %v240
    %v242 = vsel %vm230, %v220, %v223
    %v243 = vsel %vm233, %v229, 1326507024
    %v244 = vsel %vm232, %v226, %v243
    %v245 = vsel %vm231, %v242, %v244
    %v246 = vshll.u32 %v206, 8
    %v247 = vmul.u32.u64.compose %v246, %v245
    %v248 = vextract.low.u32 %v247
    %v249 = vextract.high.u32 %v247
    %v250 = vmul.u32.u64.compose %v246, %v241
    %v251 = vextract.low.u32 %v250
    %v252 = vextract.high.u32 %v250
    %v253 = vmul.u32 %v246, %v237
    %v254 = vadd.s32 %v249, %v251
    %vm255 = vc.u32 %v249, %v251
    %v256 = vadd.s32 %v252, 1
    %v257 = vsel %vm255, %v256, %v252
    %v258 = vadd.s32 %v253, %v257
    %v259 = vadd.s32 %v258, 536870912
    %v260 = vshrl.u32 %v259, 30
    %v261 = vshll.u32 %v260, 30
    %v262 = vsub.s32 %v258, %v261
    %vm263 = vcmp.lt.s32.totalorder %v262, 0
    %v264 = vsub.s32 0, %v262
    %v265 = vsel %vm263, %v264, %v262
    %v266 = vclz %v265
    %v267 = vsub.s32 %v266, 2
    %vm268 = vcmp.gt.s32.totalorder 0, %v267
    %v269 = vsel %vm268, 0, %v267
    %v270 = vsub.s32 32, %v269
    %v271 = vshll.u32 %v262, %v269
    %v272 = vshrl.u32 %v254, %v270
    %v273 = vor.u32 %v271, %v272
    %v274 = vsub.s32 4294967266, %v269
    %v275 = vadd.s32 %v274, 127
    %v276 = vshll.u32 %v275, 23
    %v277 = vor.u32 4788187, %v276
    %v278 = vand.u32 2147483647, %v277
    %v280 = vcvt.s32.f32 %v273
    %v281 = vmul.f32 %v280, %v278
    %v282 = vxor.u32 %v281, 2147483648
    %v283 = vsel %vm200, %v282, %v281
    %v284 = vsub.s32 4, %v260
    %v285 = vsel %vm200, %v284, %v260
    %v286 = vsel %vm199, %v93, %v283
    %v287 = vsel %vm199, 0, %v285
    %v288 = vcosq.f32.pop %v286
    %v289 = vsinq.f32.pop %v286
    %vm290 = vweird.f32 %v93
    %v291 = vadd.s32 %v287, 3
    %v292 = vand.u32 %v291, 3
    %vm293 = vcmp.lt.s32.totalorder %v292, 2
    %vm294 = vcmp.eq.s32.totalorder %v292, 0
    %v295 = vxor.u32 %v289, 2147483648
    %v296 = vsel %vm294, %v288, %v295
    %vm297 = vcmp.eq.s32.totalorder %v292, 2
    %v298 = vxor.u32 %v288, 2147483648
    %v299 = vsel %vm297, %v298, %v289
    %v300 = vsel %vm293, %v296, %v299
    %v301 = vsel %vm290, nan, %v300
    %v302 = vld [vmem:[#allocation5] sm:$0xff]
    %v303 = vld [vmem:[#allocation5 + $0x8] sm:$0xff]
    %v304 = vld [vmem:[#allocation5 + $0x10] sm:$0xff]
    %v305 = vld [vmem:[#allocation5 + $0x18] sm:$0xff]
    %v306 = vld [vmem:[#allocation5 + $0x20] sm:$0xff]
    %v307 = vld [vmem:[#allocation5 + $0x28] sm:$0xff]
    %v308 = vld [vmem:[#allocation5 + $0x30] sm:$0xff]
    %v309 = vld [vmem:[#allocation5 + $0x38] sm:$0xff]
    %v310 = vpack.c.bf16 %v303, %v302
    %v311 = vpack.c.bf16 %v305, %v304
    %v312 = vpack.c.bf16 %v307, %v306
    %v313 = vpack.c.bf16 %v309, %v308
    %v314 = vld [vmem:[#allocation5 + $0x90] sm:$0xff]
    %v315 = vld [vmem:[#allocation5 + $0x98] sm:$0xff]
    %v316 = vld [vmem:[#allocation5 + $0xa0] sm:$0xff]
    %v317 = vld [vmem:[#allocation5 + $0xa8] sm:$0xff]
    %v318 = vld [vmem:[#allocation5 + $0xb0] sm:$0xff]
    %v319 = vld [vmem:[#allocation5 + $0xb8] sm:$0xff]
    %v320 = vld [vmem:[#allocation5 + $0xc0] sm:$0xff]
    %v321 = vld [vmem:[#allocation5 + $0xc8] sm:$0xff]
    %v322 = vpack.c.bf16 %v301, %v197
    %324 = vset.pattern.permute.xlu0 0
    %325 = vperm.xlu0 %324, %v314
    %v326 = vpop.permute.xlu0 %325
    %329 = vset.pattern.permute.xlu0 0
    %330 = vperm.xlu0 %329, %v315
    %v331 = vpop.permute.xlu0 %330
    %334 = vset.pattern.permute.xlu0 0
    %335 = vperm.xlu0 %334, %v316
    %v336 = vpop.permute.xlu0 %335
    %339 = vset.pattern.permute.xlu0 0
    %340 = vperm.xlu0 %339, %v317
    %v341 = vpop.permute.xlu0 %340
    %344 = vset.pattern.permute.xlu0 0
    %345 = vperm.xlu0 %344, %v318
    %v346 = vpop.permute.xlu0 %345
    %349 = vset.pattern.permute.xlu0 0
    %350 = vperm.xlu0 %349, %v319
    %v351 = vpop.permute.xlu0 %350
    %354 = vset.pattern.permute.xlu0 0
    %355 = vperm.xlu0 %354, %v320
    %v356 = vpop.permute.xlu0 %355
    %359 = vset.pattern.permute.xlu0 0
    %360 = vperm.xlu0 %359, %v321
    %v361 = vpop.permute.xlu0 %360
    %vm363 = vcmask 130048
    %v365 = vsel %vm363, %v310, 0
    %v368 = vsel %vm363, %v311, 0
    %v371 = vsel %vm363, %v312, 0
    %v374 = vsel %vm363, %v313, 0
    %376 = vmatprep.subr.bf16.mxu0 0
    %377 = vmatpush1.bf16.msra.mxu0 %v322
    %378 = vmatprep.subr.bf16.mxu0 0
    %379 = vmatpush1.bf16.msra.mxu0 0
    %380 = vmatprep.subr.bf16.mxu0 0
    %381 = vmatpush1.bf16.msra.mxu0 0
    %382 = vmatprep.subr.bf16.mxu0 0
    %383 = vmatpush1.bf16.msra.mxu0 0
    %384 = vmatprep.subr.bf16.mxu0 0
    %385 = vmatpush1.bf16.msra.mxu0 0
    %386 = vmatprep.subr.bf16.mxu0 0
    %387 = vmatpush1.bf16.msra.mxu0 0
    %388 = vmatprep.subr.bf16.mxu0 0
    %389 = vmatpush1.bf16.msra.mxu0 0
    %390 = vmatprep.subr.bf16.mxu0 0
    %391 = vmatpush1.bf16.msra.mxu0 0
    %392 = vmatprep.subr.bf16.mxu0 0
    %393 = vmatpush1.bf16.msra.mxu0 0
    %394 = vmatprep.subr.bf16.mxu0 0
    %395 = vmatpush1.bf16.msra.mxu0 0
    %396 = vmatprep.subr.bf16.mxu0 0
    %397 = vmatpush1.bf16.msra.mxu0 0
    %398 = vmatprep.subr.bf16.mxu0 0
    %399 = vmatpush1.bf16.msra.mxu0 0
    %400 = vmatprep.subr.bf16.mxu0 0
    %401 = vmatpush1.bf16.msra.mxu0 0
    %402 = vmatprep.subr.bf16.mxu0 0
    %403 = vmatpush1.bf16.msra.mxu0 0
    %404 = vmatprep.subr.bf16.mxu0 0
    %405 = vmatpush1.bf16.msra.mxu0 0
    %406 = vmatprep.subr.bf16.mxu0 0
    %407 = vmatpush1.bf16.msra.mxu0 0
    %408 = vmatprep.mubr.bf16.mxu0 0
    %409 = vmatmul.mubr.bf16.gmra.mrb[0].mxu0 %v365
    %v410 = vpop.f32.mrb[0].mxu0
    %v411 = vadd.f32 %v326, %v410
    %v412 = vpop.f32.mrb[0].mxu0
    %v413 = vpop.f32.mrb[0].mxu0
    %v414 = vadd.f32 %v331, %v413
    %v415 = vpop.f32.mrb[0].mxu0
    %416 = vmatprep.mubr.bf16.mxu0 0
    %417 = vmatmul.mubr.bf16.gmra.mrb[0].mxu0 %v368
    %v418 = vpop.f32.mrb[0].mxu0
    %v419 = vadd.f32 %v336, %v418
    %v420 = vpop.f32.mrb[0].mxu0
    %v421 = vpop.f32.mrb[0].mxu0
    %v422 = vadd.f32 %v341, %v421
    %v423 = vpop.f32.mrb[0].mxu0
    %424 = vmatprep.mubr.bf16.mxu0 0
    %425 = vmatmul.mubr.bf16.gmra.mrb[0].mxu0 %v371
    %v426 = vpop.f32.mrb[0].mxu0
    %v427 = vadd.f32 %v346, %v426
    %v428 = vpop.f32.mrb[0].mxu0
    %v429 = vpop.f32.mrb[0].mxu0
    %v430 = vadd.f32 %v351, %v429
    %v431 = vpop.f32.mrb[0].mxu0
    %432 = vmatprep.mubr.bf16.mxu0 0
    %433 = vmatmul.mubr.bf16.gmra.mrb[0].mxu0 %v374
    %v434 = vpop.f32.mrb[0].mxu0
    %v435 = vadd.f32 %v356, %v434
    %v436 = vpop.f32.mrb[0].mxu0
    %v437 = vpop.f32.mrb[0].mxu0
    %v438 = vadd.f32 %v361, %v437
    %v439 = vpop.f32.mrb[0].mxu0
    %440 = vdwg.mxu0
    %v441 = vmul.f32 %v411, 0.5
    %v442 = vmul.f32 %v414, 0.5
    %v443 = vmul.f32 %v419, 0.5
    %v444 = vmul.f32 %v422, 0.5
    %v445 = vmul.f32 %v427, 0.5
    %v446 = vmul.f32 %v430, 0.5
    %v447 = vmul.f32 %v435, 0.5
    %v448 = vmul.f32 %v438, 0.5
    %v449 = vmul.f32 %v411, 0.044715
    %v450 = vmul.f32 %v414, 0.044715
    %v451 = vmul.f32 %v419, 0.044715
    %v452 = vmul.f32 %v422, 0.044715
    %v453 = vmul.f32 %v427, 0.044715
    %v454 = vmul.f32 %v430, 0.044715
    %v455 = vmul.f32 %v435, 0.044715
    %v456 = vmul.f32 %v438, 0.044715
    %v457 = vmul.f32 %v449, %v411
    %v458 = vmul.f32 %v450, %v414
    %v459 = vmul.f32 %v451, %v419
    %v460 = vmul.f32 %v452, %v422
    %v461 = vmul.f32 %v453, %v427
    %v462 = vmul.f32 %v454, %v430
    %v463 = vmul.f32 %v455, %v435
    %v464 = vmul.f32 %v456, %v438
    %v465 = vmul.f32 %v457, %v411
    %v466 = vmul.f32 %v458, %v414
    %v467 = vmul.f32 %v459, %v419
    %v468 = vmul.f32 %v460, %v422
    %v469 = vmul.f32 %v461, %v427
    %v470 = vmul.f32 %v462, %v430
    %v471 = vmul.f32 %v463, %v435
    %v472 = vmul.f32 %v464, %v438
    %v473 = vadd.f32 %v411, %v465
    %v474 = vadd.f32 %v414, %v466
    %v475 = vadd.f32 %v419, %v467
    %v476 = vadd.f32 %v422, %v468
    %v477 = vadd.f32 %v427, %v469
    %v478 = vadd.f32 %v430, %v470
    %v479 = vadd.f32 %v435, %v471
    %v480 = vadd.f32 %v438, %v472
    %v481 = vmul.f32 %v473, 0.7978846
    %v482 = vmul.f32 %v474, 0.7978846
    %v483 = vmul.f32 %v475, 0.7978846
    %v484 = vmul.f32 %v476, 0.7978846
    %v485 = vmul.f32 %v477, 0.7978846
    %v486 = vmul.f32 %v478, 0.7978846
    %v487 = vmul.f32 %v479, 0.7978846
    %v488 = vmul.f32 %v480, 0.7978846
    %v489 = vtanh.pop %v481
    %v490 = vtanh.pop %v482
    %v491 = vtanh.pop %v483
    %v492 = vtanh.pop %v484
    %v493 = vtanh.pop %v485
    %v494 = vtanh.pop %v486
    %v495 = vtanh.pop %v487
    %v496 = vtanh.pop %v488
    %v497 = vadd.f32 %v489, 1.0
    %v498 = vadd.f32 %v490, 1.0
    %v499 = vadd.f32 %v491, 1.0
    %v500 = vadd.f32 %v492, 1.0
    %v501 = vadd.f32 %v493, 1.0
    %v502 = vadd.f32 %v494, 1.0
    %v503 = vadd.f32 %v495, 1.0
    %v504 = vadd.f32 %v496, 1.0
    %v505 = vmul.f32 %v441, %v497
    %v506 = vmul.f32 %v442, %v498
    %v507 = vmul.f32 %v443, %v499
    %v508 = vmul.f32 %v444, %v500
    %v509 = vmul.f32 %v445, %v501
    %v510 = vmul.f32 %v446, %v502
    %v511 = vmul.f32 %v447, %v503
    %v512 = vmul.f32 %v448, %v504
    %v513 = vld [vmem:[#allocation5 + $0x40] sm:$0xff]
    %v514 = vld [vmem:[#allocation5 + $0x48] sm:$0xff]
    %v515 = vpack.c.bf16 %v514, %v513
    %v516 = vpack.c.bf16 %v506, %v505
    %v517 = vpack.c.bf16 %v508, %v507
    %v518 = vpack.c.bf16 %v510, %v509
    %v519 = vpack.c.bf16 %v512, %v511
    %520 = vset.pattern.permute.xlu0 4
    %521 = vperm.xlu0 %520, %v41
    %v522 = vpop.permute.xlu0 %521
    %524 = vset.pattern.permute.xlu0 4
    %525 = vperm.xlu0 %524, %v42
    %v526 = vpop.permute.xlu0 %525
    %vm528 = vcmask 523264
    %v530 = vsel %vm528, %v515, 0
    %532 = vmatprep.subr.bf16.mxu0 0
    %533 = vmatpush1.bf16.msra.mxu0 %v516
    %534 = vmatprep.subr.bf16.mxu0 0
    %535 = vmatpush1.bf16.msra.mxu0 %v517
    %536 = vmatprep.subr.bf16.mxu0 0
    %537 = vmatpush1.bf16.msra.mxu0 %v518
    %538 = vmatprep.subr.bf16.mxu0 0
    %539 = vmatpush1.bf16.msra.mxu0 %v519
    %540 = vmatprep.subr.bf16.mxu0 0
    %541 = vmatpush1.bf16.msra.mxu0 0
    %542 = vmatprep.subr.bf16.mxu0 0
    %543 = vmatpush1.bf16.msra.mxu0 0
    %544 = vmatprep.subr.bf16.mxu0 0
    %545 = vmatpush1.bf16.msra.mxu0 0
    %546 = vmatprep.subr.bf16.mxu0 0
    %547 = vmatpush1.bf16.msra.mxu0 0
    %548 = vmatprep.subr.bf16.mxu0 0
    %549 = vmatpush1.bf16.msra.mxu0 0
    %550 = vmatprep.subr.bf16.mxu0 0
    %551 = vmatpush1.bf16.msra.mxu0 0
    %552 = vmatprep.subr.bf16.mxu0 0
    %553 = vmatpush1.bf16.msra.mxu0 0
    %554 = vmatprep.subr.bf16.mxu0 0
    %555 = vmatpush1.bf16.msra.mxu0 0
    %556 = vmatprep.subr.bf16.mxu0 0
    %557 = vmatpush1.bf16.msra.mxu0 0
    %558 = vmatprep.subr.bf16.mxu0 0
    %559 = vmatpush1.bf16.msra.mxu0 0
    %560 = vmatprep.subr.bf16.mxu0 0
    %561 = vmatpush1.bf16.msra.mxu0 0
    %562 = vmatprep.subr.bf16.mxu0 0
    %563 = vmatpush1.bf16.msra.mxu0 0
    %564 = vmatprep.mubr.bf16.mxu0 0
    %565 = vmatmul.mubr.bf16.gmra.mrb[0].mxu0 %v530
    %v566 = vpop.f32.mrb[0].mxu0
    %v567 = vadd.f32 %v522, %v566
    %v568 = vpop.f32.mrb[0].mxu0
    %v569 = vpop.f32.mrb[0].mxu0
    %v570 = vadd.f32 %v526, %v569
    %v571 = vpop.f32.mrb[0].mxu0
    %572 = vdwg.mxu0
    %v573 = vadd.f32 %v68, %v567
    %v574 = vadd.f32 %v69, %v570
    %v575 = vmul.f32 %v573, 0.5
    %v576 = vmul.f32 %v574, 0.5
    %v577 = vmul.f32 %v573, 0.044715
    %v578 = vmul.f32 %v574, 0.044715
    %v579 = vmul.f32 %v577, %v573
    %v580 = vmul.f32 %v578, %v574
    %v581 = vmul.f32 %v579, %v573
    %v582 = vmul.f32 %v580, %v574
    %v583 = vadd.f32 %v573, %v581
    %v584 = vadd.f32 %v574, %v582
    %v585 = vmul.f32 %v583, 0.7978846
    %v586 = vmul.f32 %v584, 0.7978846
    %v587 = vtanh.pop %v585
    %v588 = vtanh.pop %v586
    %v589 = vadd.f32 %v587, 1.0
    %v590 = vadd.f32 %v588, 1.0
    %v591 = vmul.f32 %v575, %v589
    %v592 = vmul.f32 %v576, %v590
    %v593 = vld [vmem:[#allocation5 + $0x50] sm:$0xff]
    %v594 = vld [vmem:[#allocation5 + $0x58] sm:$0xff]
    %v595 = vpack.c.bf16 %v594, %v593
    %v596 = vpack.c.bf16 %v592, %v591
    %597 = vset.pattern.permute.xlu0 5
    %598 = vperm.xlu0 %597, %v41
    %v599 = vpop.permute.xlu0 %598
    %601 = vset.pattern.permute.xlu0 5
    %602 = vperm.xlu0 %601, %v42
    %v603 = vpop.permute.xlu0 %602
    %v606 = vsel %vm363, %v595, 0
    %608 = vmatprep.subr.bf16.mxu0 0
    %609 = vmatpush1.bf16.msra.mxu0 %v596
    %610 = vmatprep.subr.bf16.mxu0 0
    %611 = vmatpush1.bf16.msra.mxu0 0
    %612 = vmatprep.subr.bf16.mxu0 0
    %613 = vmatpush1.bf16.msra.mxu0 0
    %614 = vmatprep.subr.bf16.mxu0 0
    %615 = vmatpush1.bf16.msra.mxu0 0
    %616 = vmatprep.subr.bf16.mxu0 0
    %617 = vmatpush1.bf16.msra.mxu0 0
    %618 = vmatprep.subr.bf16.mxu0 0
    %619 = vmatpush1.bf16.msra.mxu0 0
    %620 = vmatprep.subr.bf16.mxu0 0
    %621 = vmatpush1.bf16.msra.mxu0 0
    %622 = vmatprep.subr.bf16.mxu0 0
    %623 = vmatpush1.bf16.msra.mxu0 0
    %624 = vmatprep.subr.bf16.mxu0 0
    %625 = vmatpush1.bf16.msra.mxu0 0
    %626 = vmatprep.subr.bf16.mxu0 0
    %627 = vmatpush1.bf16.msra.mxu0 0
    %628 = vmatprep.subr.bf16.mxu0 0
    %629 = vmatpush1.bf16.msra.mxu0 0
    %630 = vmatprep.subr.bf16.mxu0 0
    %631 = vmatpush1.bf16.msra.mxu0 0
    %632 = vmatprep.subr.bf16.mxu0 0
    %633 = vmatpush1.bf16.msra.mxu0 0
    %634 = vmatprep.subr.bf16.mxu0 0
    %635 = vmatpush1.bf16.msra.mxu0 0
    %636 = vmatprep.subr.bf16.mxu0 0
    %637 = vmatpush1.bf16.msra.mxu0 0
    %638 = vmatprep.subr.bf16.mxu0 0
    %639 = vmatpush1.bf16.msra.mxu0 0
    %640 = vmatprep.mubr.bf16.mxu0 0
    %641 = vmatmul.mubr.bf16.gmra.mrb[0].mxu0 %v606
    %v642 = vpop.f32.mrb[0].mxu0
    %v643 = vadd.f32 %v599, %v642
    %v644 = vpop.f32.mrb[0].mxu0
    %v645 = vpop.f32.mrb[0].mxu0
    %v646 = vadd.f32 %v603, %v645
    %v647 = vpop.f32.mrb[0].mxu0
    %648 = vdwg.mxu0
    %v649 = vmul.f32 %v643, 0.5
    %v650 = vmul.f32 %v646, 0.5
    %v651 = vmul.f32 %v643, 0.044715
    %v652 = vmul.f32 %v646, 0.044715
    %v653 = vmul.f32 %v651, %v643
    %v654 = vmul.f32 %v652, %v646
    %v655 = vmul.f32 %v653, %v643
    %v656 = vmul.f32 %v654, %v646
    %v657 = vadd.f32 %v643, %v655
    %v658 = vadd.f32 %v646, %v656
    %v659 = vmul.f32 %v657, 0.7978846
    %v660 = vmul.f32 %v658, 0.7978846
    %v661 = vtanh.pop %v659
    %v662 = vtanh.pop %v660
    %v663 = vadd.f32 %v661, 1.0
    %v664 = vadd.f32 %v662, 1.0
    %v665 = vmul.f32 %v649, %v663
    %v666 = vmul.f32 %v650, %v664
    %v667 = vld [vmem:[#allocation5 + $0x60] sm:$0xff]
    %v668 = vld [vmem:[#allocation5 + $0x68] sm:$0xff]
    %v669 = vpack.c.bf16 %v668, %v667
    %v670 = vpack.c.bf16 %v666, %v665
    %671 = vset.pattern.permute.xlu0 6
    %672 = vperm.xlu0 %671, %v41
    %v673 = vpop.permute.xlu0 %672
    %675 = vset.pattern.permute.xlu0 6
    %676 = vperm.xlu0 %675, %v42
    %v677 = vpop.permute.xlu0 %676
    %v680 = vsel %vm363, %v669, 0
    %682 = vmatprep.subr.bf16.mxu0 0
    %683 = vmatpush1.bf16.msra.mxu0 %v670
    %684 = vmatprep.subr.bf16.mxu0 0
    %685 = vmatpush1.bf16.msra.mxu0 0
    %686 = vmatprep.subr.bf16.mxu0 0
    %687 = vmatpush1.bf16.msra.mxu0 0
    %688 = vmatprep.subr.bf16.mxu0 0
    %689 = vmatpush1.bf16.msra.mxu0 0
    %690 = vmatprep.subr.bf16.mxu0 0
    %691 = vmatpush1.bf16.msra.mxu0 0
    %692 = vmatprep.subr.bf16.mxu0 0
    %693 = vmatpush1.bf16.msra.mxu0 0
    %694 = vmatprep.subr.bf16.mxu0 0
    %695 = vmatpush1.bf16.msra.mxu0 0
    %696 = vmatprep.subr.bf16.mxu0 0
    %697 = vmatpush1.bf16.msra.mxu0 0
    %698 = vmatprep.subr.bf16.mxu0 0
    %699 = vmatpush1.bf16.msra.mxu0 0
    %700 = vmatprep.subr.bf16.mxu0 0
    %701 = vmatpush1.bf16.msra.mxu0 0
    %702 = vmatprep.subr.bf16.mxu0 0
    %703 = vmatpush1.bf16.msra.mxu0 0
    %704 = vmatprep.subr.bf16.mxu0 0
    %705 = vmatpush1.bf16.msra.mxu0 0
    %706 = vmatprep.subr.bf16.mxu0 0
    %707 = vmatpush1.bf16.msra.mxu0 0
    %708 = vmatprep.subr.bf16.mxu0 0
    %709 = vmatpush1.bf16.msra.mxu0 0
    %710 = vmatprep.subr.bf16.mxu0 0
    %711 = vmatpush1.bf16.msra.mxu0 0
    %712 = vmatprep.subr.bf16.mxu0 0
    %713 = vmatpush1.bf16.msra.mxu0 0
    %714 = vmatprep.mubr.bf16.mxu0 0
    %715 = vmatmul.mubr.bf16.gmra.mrb[0].mxu0 %v680
    %v716 = vpop.f32.mrb[0].mxu0
    %v717 = vadd.f32 %v673, %v716
    %v718 = vpop.f32.mrb[0].mxu0
    %v719 = vpop.f32.mrb[0].mxu0
    %v720 = vadd.f32 %v677, %v719
    %v721 = vpop.f32.mrb[0].mxu0
    %722 = vdwg.mxu0
    %v723 = vmul.f32 %v717, 0.5
    %v724 = vmul.f32 %v720, 0.5
    %v725 = vmul.f32 %v717, 0.044715
    %v726 = vmul.f32 %v720, 0.044715
    %v727 = vmul.f32 %v725, %v717
    %v728 = vmul.f32 %v726, %v720
    %v729 = vmul.f32 %v727, %v717
    %v730 = vmul.f32 %v728, %v720
    %v731 = vadd.f32 %v717, %v729
    %v732 = vadd.f32 %v720, %v730
    %v733 = vmul.f32 %v731, 0.7978846
    %v734 = vmul.f32 %v732, 0.7978846
    %v735 = vtanh.pop %v733
    %v736 = vtanh.pop %v734
    %v737 = vadd.f32 %v735, 1.0
    %v738 = vadd.f32 %v736, 1.0
    %v739 = vmul.f32 %v723, %v737
    %v740 = vmul.f32 %v724, %v738
    %v741 = vld [vmem:[#allocation5 + $0x70] sm:$0xff]
    %v742 = vld [vmem:[#allocation5 + $0x78] sm:$0xff]
    %v743 = vpack.c.bf16 %v742, %v741
    %v744 = vpack.c.bf16 %v740, %v739
    %745 = vset.pattern.permute.xlu0 7
    %746 = vperm.xlu0 %745, %v41
    %v747 = vpop.permute.xlu0 %746
    %749 = vset.pattern.permute.xlu0 7
    %750 = vperm.xlu0 %749, %v42
    %v751 = vpop.permute.xlu0 %750
    %v754 = vsel %vm363, %v743, 0
    %756 = vmatprep.subr.bf16.mxu0 0
    %757 = vmatpush1.bf16.msra.mxu0 %v744
    %758 = vmatprep.subr.bf16.mxu0 0
    %759 = vmatpush1.bf16.msra.mxu0 0
    %760 = vmatprep.subr.bf16.mxu0 0
    %761 = vmatpush1.bf16.msra.mxu0 0
    %762 = vmatprep.subr.bf16.mxu0 0
    %763 = vmatpush1.bf16.msra.mxu0 0
    %764 = vmatprep.subr.bf16.mxu0 0
    %765 = vmatpush1.bf16.msra.mxu0 0
    %766 = vmatprep.subr.bf16.mxu0 0
    %767 = vmatpush1.bf16.msra.mxu0 0
    %768 = vmatprep.subr.bf16.mxu0 0
    %769 = vmatpush1.bf16.msra.mxu0 0
    %770 = vmatprep.subr.bf16.mxu0 0
    %771 = vmatpush1.bf16.msra.mxu0 0
    %772 = vmatprep.subr.bf16.mxu0 0
    %773 = vmatpush1.bf16.msra.mxu0 0
    %774 = vmatprep.subr.bf16.mxu0 0
    %775 = vmatpush1.bf16.msra.mxu0 0
    %776 = vmatprep.subr.bf16.mxu0 0
    %777 = vmatpush1.bf16.msra.mxu0 0
    %778 = vmatprep.subr.bf16.mxu0 0
    %779 = vmatpush1.bf16.msra.mxu0 0
    %780 = vmatprep.subr.bf16.mxu0 0
    %781 = vmatpush1.bf16.msra.mxu0 0
    %782 = vmatprep.subr.bf16.mxu0 0
    %783 = vmatpush1.bf16.msra.mxu0 0
    %784 = vmatprep.subr.bf16.mxu0 0
    %785 = vmatpush1.bf16.msra.mxu0 0
    %786 = vmatprep.subr.bf16.mxu0 0
    %787 = vmatpush1.bf16.msra.mxu0 0
    %788 = vmatprep.mubr.bf16.mxu0 0
    %789 = vmatmul.mubr.bf16.gmra.mrb[0].mxu0 %v754
    %v790 = vpop.f32.mrb[0].mxu0
    %v791 = vadd.f32 %v747, %v790
    %v792 = vpop.f32.mrb[0].mxu0
    %v793 = vpop.f32.mrb[0].mxu0
    %v794 = vadd.f32 %v751, %v793
    %v795 = vpop.f32.mrb[0].mxu0
    %796 = vdwg.mxu0
    %v797 = vmul.f32 %v791, 0.5
    %v798 = vmul.f32 %v794, 0.5
    %v799 = vmul.f32 %v791, 0.044715
    %v800 = vmul.f32 %v794, 0.044715
    %v801 = vmul.f32 %v799, %v791
    %v802 = vmul.f32 %v800, %v794
    %v803 = vmul.f32 %v801, %v791
    %v804 = vmul.f32 %v802, %v794
    %v805 = vadd.f32 %v791, %v803
    %v806 = vadd.f32 %v794, %v804
    %v807 = vmul.f32 %v805, 0.7978846
    %v808 = vmul.f32 %v806, 0.7978846
    %v809 = vtanh.pop %v807
    %v810 = vtanh.pop %v808
    %v811 = vadd.f32 %v809, 1.0
    %v812 = vadd.f32 %v810, 1.0
    %v813 = vmul.f32 %v797, %v811
    %v814 = vmul.f32 %v798, %v812
    %815 = vset.pattern.permute.xlu0 8
    %816 = vperm.xlu0 %815, %v41
    %v817 = vpop.permute.xlu0 %816
    %819 = vset.pattern.permute.xlu0 8
    %820 = vperm.xlu0 %819, %v42
    %v821 = vpop.permute.xlu0 %820
    %v823 = vmul.f32 %v813, %v817
    %v824 = vmul.f32 %v814, %v821
    %v825 = vadd.f32 %v823, %v824
    %v826 = vrot.slane %v825, 4
    %v827 = vadd.f32 %v825, %v826
    %v828 = vrot.slane %v827, 2
    %v829 = vadd.f32 %v827, %v828
    %v830 = vrot.slane %v829, 1
    %v831 = vadd.f32 %v829, %v830
    %833 = vset.pattern.permute.xlu0 9
    %834 = vperm.xlu0 %833, %v43
    %v835 = vpop.permute.xlu0 %834
    %v837 = vadd.f32 %v831, %v835
    %838 = vst [vmem:[#allocation7] sm:$0x1] %v837
    // Predicated region
    $region18: #{tpu_custom_call.1} parent=1 // pred_check
      _
    $region19: #{tpu_custom_call.1} parent=1 // pred_check_branch
      %840 = sbr.rel (0) target = $region21
    $region20: #{tpu_custom_call.1} parent=1 // pred_region
      %s842 = ssub.s32 16, 16
      %843 = vsyncadd [#allocation4], %s842
      %s845 = sshll.u32 [#allocation7], 4
      %s846 = int_to_ptr.vmem [resolvable:$true] %s845
      %848 = dma.vmem_to_hbm [thread:$0]  %s846, 16, %s2, [#allocation4]
    $region21: #{tpu_custom_call.1} parent=1 // pred_fallthru
      _
    // Predicated region
    $region22: #{tpu_custom_call.1} parent=1 // pred_check
      _
    $region23: #{tpu_custom_call.1} parent=1 // pred_check_branch
      %850 = sbr.rel (0) target = $region25
    $region24: #{tpu_custom_call.1} parent=1 // pred_region
      %851 = dma.done [#allocation4], 16
    $region25: #{tpu_custom_call.1} parent=1 // pred_fallthru
      _
    %852 = vsyncpa [#allocation3], 1
    %853 = vsyncpa [#allocation6], 1
    %854 = vsyncpa [#allocation4], 1

</llo_original>
